<compile_context>
chip_gen: v5e
topology: v5e:2x2
jax: 0.10.0
libtpu: 0.0.40
codegen_flags: <defaults>
</compile_context>

<pallas_src>
import functools
import numpy as np
import jax
import jax.numpy as jnp
from jax import lax
from jax.experimental import pallas as pl
from jax.experimental.pallas import tpu as pltpu

KS = 3       # kernel size
NFILT = 9    # framelet sub-bands per channel (3 vertical x 3 horizontal filters)


def _framelet_1d_filters() -> np.ndarray:
    """Piecewise-linear B-spline framelet 1-D bank: 3 filters x 3 taps."""
    return np.array(
        [
            [0.25, 0.5, 0.25],
            [np.sqrt(2.0) / 4.0, 0.0, -np.sqrt(2.0) / 4.0],
            [-0.25, 0.5, -0.25],
        ],
        dtype=np.float32,
    )


def _framelet_bank(channel: int):
    """Deterministic stand-in for the pickled 'f{C}' framelet weights.

    Returns (hv, hh, bank):
      hv, hh: (C, 3, 3) per-channel 1-D filters (rows / columns)
      bank:   (C, 9, 3, 3) full 3x3 filters, bank[c, 3a+b] = outer(hv[c,a], hh[c,b])
              == the torch grouped-conv weight (9*C, 1, 3, 3) regrouped.
    """
    h = _framelet_1d_filters()
    hv = np.tile(h[None], (channel, 1, 1)).astype(np.float32)
    hh = np.tile(h[None], (channel, 1, 1)).astype(np.float32)
    bank = np.einsum("cad,cbe->cabde", hv, hh).reshape(channel, NFILT, KS, KS)
    return hv, hh, bank.astype(np.float32)


def framelet_dec_kernel(x_ref, hv_ref, hh_ref, lm_ref, rm_ref, o_ref,
                        *, w, hw, channel_major):
    """Separable 3x3 grouped framelet decomposition for one (batch, channel block).

    x_ref : (1, Cblk, HWP) flat-spatial input (HWP = HW padded to 128 lanes)
    hv_ref: (Cblk, 9) vertical   taps, hv_ref[c, 3a+di]
    hh_ref: (Cblk, 9) horizontal taps, hh_ref[c, 3b+dj]
    lm_ref: (1, HWP) 0/1 mask, 0 where col == 0      (kills row-wrap of j-1 tap)
    rm_ref: (1, HWP) 0/1 mask, 0 where col == W-1    (kills row-wrap of j+1 tap)
    o_ref : (1, 9, Cblk, HWP) if not channel_major   (transpose=True ordering)
            (1, Cblk, 9, HWP) if channel_major       (transpose=False ordering)
    """
    hwp = x_ref.shape[2]

    x = x_ref[0]                                   # (Cblk, HWP), f32
    if x.dtype != jnp.float32:
        x = x.astype(jnp.float32)

    # Boundary masks for the vertical +/-W taps, built in-kernel from an iota
    # (these replace the old zero apron; no extra HBM traffic).
    pos = lax.broadcasted_iota(jnp.int32, (1, hwp), 1)
    not_top = pos >= w                             # False on row i == 0
    not_bot = pos < (hw - w)                       # False on row i == H-1 (and pad tail)
    not_left = lm_ref[...] != 0.0                  # False where col == 0
    not_right = rm_ref[...] != 0.0                 # False where col == W-1

    # Vertical neighbour rows via XLU lane rotation of the flat row-major layout.
    # roll(x, s)[p] == x[(p - s) mod HWP]; the wrap positions are exactly the
    # masked boundary rows, so jnp.where restores true zero padding.
    x_up = jnp.where(not_top, pltpu.roll(x, w, axis=1), 0.0)        # x[i-1, j]
    x_dn = jnp.where(not_bot, pltpu.roll(x, hwp - w, axis=1), 0.0)  # x[i+1, j]

    # Hoist per-channel tap columns out of the unrolled loops (no redundant
    # slice/broadcast per band).
    hvv = hv_ref[...]
    hhv = hh_ref[...]
    hv_t = [hvv[:, t:t + 1] for t in range(NFILT)]   # (Cblk, 1) each
    hh_t = [hhv[:, t:t + 1] for t in range(NFILT)]

    for a in range(KS):                              # vertical 3-tap pass
        v = hv_t[3 * a + 0] * x_up + hv_t[3 * a + 1] * x + hv_t[3 * a + 2] * x_dn
        # Horizontal shifted views (computed once, reused by 3 filters).
        v_l = jnp.where(not_left, pltpu.roll(v, 1, axis=1), 0.0)         # v[i, j-1]
        v_r = jnp.where(not_right, pltpu.roll(v, hwp - 1, axis=1), 0.0)  # v[i, j+1]
        for b in range(KS):                          # horizontal 3-tap pass
            band = (hh_t[3 * b + 0] * v_l
                    + hh_t[3 * b + 1] * v
                    + hh_t[3 * b + 2] * v_r)         # (Cblk, HWP), f32
            k = 3 * a + b
            if channel_major:
                o_ref[0, :, k, :] = band.astype(o_ref.dtype)   # channel-major store
            else:
                o_ref[0, k] = band.astype(o_ref.dtype)         # lane-dense store


def _vmem_capacity_bytes() -> int:
    """Physical VMEM of the current chip (conservative 64 MiB fallback)."""
    cap = 64 * 1024 * 1024
    try:
        info = pltpu.get_tpu_info()
        cap = int(getattr(info, "vmem_capacity_bytes", cap))
    except Exception:
        pass
    return cap


def _pick_channel_block(C: int, hwpad: int, vmem_cap: int, n_batch: int) -> int:
    """Largest channel block whose double-buffered in/out blocks plus in-kernel
    temporaries fit comfortably under the chip's VMEM, respecting the
    second-minor blocking rule (cblk == C or cblk % 8 == 0).  When N == 1,
    prefer a block that still leaves >= 2 grid steps (v7x dual TensorCore)."""
    # per-channel f32 bytes per grid step:
    #   2x input block + 2x (9-wide) output block (double buffering) + ~8 temps
    per_chan = 4 * hwpad * (2 * 1 + 2 * NFILT + 8)
    budget = max(vmem_cap - 16 * 1024 * 1024, 8 * 1024 * 1024)
    cands = sorted((c for c in range(1, C + 1)
                    if C % c == 0 and (c == C or c % 8 == 0)), reverse=True)
    fitting = [c for c in cands if c * per_chan <= budget]
    if not fitting:
        # TODO(synk): add a spatial row-tile grid axis (1-row halo) for images
        # too large to fit a single channel block in VMEM.
        return cands[-1]
    if n_batch == 1:
        multi = [c for c in fitting if C // c >= 2]
        if multi:
            return multi[0]
    return fitting[0]


def framelet_transform(x: jax.Array, hv: jax.Array, hh: jax.Array,
                       transpose: bool = True,
                       out_dtype=jnp.float32):
    """dec=True forward of FrameletTransform.

    x : (N, C, H, W) float32
    hv: (C, 3, 3) per-channel vertical (row) 1-D filters
    hh: (C, 3, 3) per-channel horizontal (col) 1-D filters
        (filter k = 3a+b of the grouped Conv2d bank is outer(hv[c,a], hh[c,b]))
    out_dtype: jnp.float32 (default, matches torch) or jnp.bfloat16 to halve the
        dominant 9x HBM writeback if downstream tolerates it.
    """
    N, C, H, W = x.shape
    HW = H * W
    lane_pad = (-HW) % 128            # keep band stores unmasked full-lane vst
    HWP = HW + lane_pad

    # Flat spatial view: free reshape, no apron, no extra HBM pass.
    xf = x.reshape(N, C, HW)
    if xf.dtype != jnp.float32:
        xf = xf.astype(jnp.float32)
    if lane_pad:
        xf = jnp.pad(xf, ((0, 0), (0, 0), (0, lane_pad)))

    hv2 = hv.reshape(C, NFILT).astype(jnp.float32)
    hh2 = hh.reshape(C, NFILT).astype(jnp.float32)

    # Tiny 0/1 column-boundary masks (left / right neighbour row-wrap kill).
    col = np.arange(HWP) % W
    col[HW:] = 0
    lmask = jnp.asarray(((np.arange(HWP) < HW) & (col != 0)
                         ).astype(np.float32)[None, :])        # (1, HWP)
    rmask = jnp.asarray(((np.arange(HWP) < HW) & (col != W - 1)
                         ).astype(np.float32)[None, :])        # (1, HWP)

    vmem_cap = _vmem_capacity_bytes()
    cblk = _pick_channel_block(C, HWP, vmem_cap, N)

    resident = cblk * 4 * HWP * (2 * 1 + 2 * NFILT + 8) + (4 << 20)
    vmem_limit = int(min(vmem_cap - (4 << 20), max(32 << 20, resident)))
    vmem_limit = max(vmem_limit, 16 << 20)

    cost = pl.CostEstimate(
        flops=2 * 36 * N * C * HW,                 # separable 2-pass MACs
        transcendentals=0,
        bytes_accessed=4 * N * C * HW * (1 + NFILT),
    )

    kernel = functools.partial(framelet_dec_kernel, w=W, hw=HW,
                               channel_major=not transpose)

    if transpose:
        # Kernel emits (N, 9, C, HW): the torch view/transpose/view is a free reshape.
        out_shape = jax.ShapeDtypeStruct((N, NFILT, C, HWP), out_dtype)
        out_spec = pl.BlockSpec((1, NFILT, cblk, HWP), lambda n, cb: (n, 0, cb, 0))
    else:
        # Kernel emits channel-major (N, C, 9, HW) directly: no wrapper transpose.
        out_shape = jax.ShapeDtypeStruct((N, C, NFILT, HWP), out_dtype)
        out_spec = pl.BlockSpec((1, cblk, NFILT, HWP), lambda n, cb: (n, cb, 0, 0))

    out = pl.pallas_call(
        kernel,
        out_shape=out_shape,
        grid=(N, C // cblk),
        in_specs=[
            pl.BlockSpec((1, cblk, HWP), lambda n, cb: (n, cb, 0)),
            pl.BlockSpec((cblk, NFILT), lambda n, cb: (cb, 0)),
            pl.BlockSpec((cblk, NFILT), lambda n, cb: (cb, 0)),
            pl.BlockSpec((1, HWP), lambda n, cb: (0, 0)),
            pl.BlockSpec((1, HWP), lambda n, cb: (0, 0)),
        ],
        out_specs=out_spec,
        compiler_params=pltpu.CompilerParams(
            dimension_semantics=("parallel", "parallel"),
            vmem_limit_bytes=vmem_limit,
        ),
        cost_estimate=cost,
    )(xf, hv2, hh2, lmask, rmask)

    if lane_pad:
        out = out[..., :HW]
    if transpose:
        return out.reshape(N, NFILT * C, H, W)
    return out.reshape(N, C * NFILT, H, W)

# TODO(synk): dec=False (ConvTranspose2d reconstruction) branch not implemented;
# only the default dec=True decomposition path is covered.
# TODO(synk): a non-separable custom pickled bank would need the generic 9-tap
# kernel (or wrapper-side rank-1 factorization); the module's framelet bank is
# separable by construction.


def _reference(x, bank, transpose=True):
    """Pure-JAX reference (grouped conv via lax) for validation."""
    N, C, H, W = x.shape
    w_oihw = bank.reshape(C * NFILT, 1, KS, KS)   # torch grouped weight layout
    y = lax.conv_general_dilated(
        x, w_oihw, window_strides=(1, 1), padding=((1, 1), (1, 1)),
        dimension_numbers=("NCHW", "OIHW", "NCHW"), feature_group_count=C,
        precision=lax.Precision.HIGHEST,
    )
    if transpose:
        y = (y.reshape(N, C, NFILT, H, W)
               .transpose(0, 2, 1, 3, 4)
               .reshape(N, NFILT * C, H, W))
    return y


if __name__ == "__main__":
    N, C, H, W = 2, 4, 16, 16
    key = jax.random.PRNGKey(0)
    x = jax.random.normal(key, (N, C, H, W), dtype=jnp.float32)

    hv_np, hh_np, bank_np = _framelet_bank(C)
    hv = jnp.asarray(hv_np)
    hh = jnp.asarray(hh_np)
    bank = jnp.asarray(bank_np)

    out = jax.block_until_ready(framelet_transform(x, hv, hh, transpose=True))
    ref = _reference(x, bank, transpose=True)
    assert out.shape == (N, NFILT * C, H, W), out.shape
    np.testing.assert_allclose(np.asarray(out), np.asarray(ref), rtol=1e-5, atol=1e-5)

    # also exercise the transpose=False (native grouped-conv / channel-major) path
    out2 = jax.block_until_ready(framelet_transform(x, hv, hh, transpose=False))
    ref2 = _reference(x, bank, transpose=False)
    np.testing.assert_allclose(np.asarray(out2), np.asarray(ref2), rtol=1e-5, atol=1e-5)

    print("KERNEL_OK")
</pallas_src>

<mosaic_0001>
module attributes {stable_mosaic.version = 11 : i64} {
  func.func @framelet_dec_kernel(%arg0: i32, %arg1: i32, %arg2: memref<1x4x256xf32, #tpu.memory_space<vmem>>, %arg3: memref<4x9xf32, #tpu.memory_space<vmem>>, %arg4: memref<4x9xf32, #tpu.memory_space<vmem>>, %arg5: memref<1x256xf32, #tpu.memory_space<vmem>>, %arg6: memref<1x256xf32, #tpu.memory_space<vmem>>, %arg7: memref<1x9x4x256xf32, #tpu.memory_space<vmem>>) attributes {dimension_semantics = [#tpu.dimension_semantics<parallel>, #tpu.dimension_semantics<parallel>], iteration_bounds = array<i64: 2, 1>, scalar_prefetch = 0 : i64, scratch_operands = 0 : i64, tpu.core_type = #tpu.core_type<tc>, window_params = [{transform_indices = @transform_0, window_bounds = array<i64: 1, 4, 256>}, {transform_indices = @transform_1, window_bounds = array<i64: 4, 9>}, {transform_indices = @transform_2, window_bounds = array<i64: 4, 9>}, {pipeline_mode = #tpu.pipeline_mode<synchronous>, transform_indices = @transform_3, window_bounds = array<i64: 1, 256>}, {pipeline_mode = #tpu.pipeline_mode<synchronous>, transform_indices = @transform_4, window_bounds = array<i64: 1, 256>}, {transform_indices = @transform_5, window_bounds = array<i64: 1, 9, 4, 256>}]} {
    %c0 = arith.constant 0 : index
    %c0_0 = arith.constant 0 : index
    %c0_1 = arith.constant 0 : index
    %0 = vector.load %arg2[%c0, %c0_0, %c0_1] : memref<1x4x256xf32, #tpu.memory_space<vmem>>, vector<1x4x256xf32>
    %1 = vector.shape_cast %0 : vector<1x4x256xf32> to vector<4x256xf32>
    %2 = tpu.iota {dimensions = array<i32: 1>} : vector<1x256xi32>
    %c16_i32 = arith.constant 16 : i32
    %3 = vector.broadcast %c16_i32 : i32 to vector<1x256xi32>
    %4 = arith.cmpi sge, %2, %3 : vector<1x256xi32>
    %c240_i32 = arith.constant 240 : i32
    %5 = vector.broadcast %c240_i32 : i32 to vector<1x256xi32>
    %6 = arith.cmpi slt, %2, %5 : vector<1x256xi32>
    %c0_2 = arith.constant 0 : index
    %c0_3 = arith.constant 0 : index
    %7 = vector.load %arg5[%c0_2, %c0_3] : memref<1x256xf32, #tpu.memory_space<vmem>>, vector<1x256xf32>
    %cst = arith.constant 0.000000e+00 : f32
    %8 = vector.broadcast %cst : f32 to vector<1x256xf32>
    %9 = arith.cmpf one, %7, %8 : vector<1x256xf32>
    %c0_4 = arith.constant 0 : index
    %c0_5 = arith.constant 0 : index
    %10 = vector.load %arg6[%c0_4, %c0_5] : memref<1x256xf32, #tpu.memory_space<vmem>>, vector<1x256xf32>
    %cst_6 = arith.constant 0.000000e+00 : f32
    %11 = vector.broadcast %cst_6 : f32 to vector<1x256xf32>
    %12 = arith.cmpf one, %10, %11 : vector<1x256xf32>
    %c16_i32_7 = arith.constant 16 : i32
    %13 = tpu.dynamic_rotate %1 by %c16_i32_7 dim 1 : vector<4x256xf32>, i32 -> vector<4x256xf32>
    %cst_8 = arith.constant 0.000000e+00 : f32
    %14 = vector.shape_cast %4 : vector<1x256xi1> to vector<1x256xi1>
    %15 = vector.broadcast %14 : vector<1x256xi1> to vector<4x256xi1>
    %16 = vector.broadcast %cst_8 : f32 to vector<4x256xf32>
    %17 = arith.select %15, %13, %16 : vector<4x256xi1>, vector<4x256xf32>
    %c240_i32_9 = arith.constant 240 : i32
    %18 = tpu.dynamic_rotate %1 by %c240_i32_9 dim 1 : vector<4x256xf32>, i32 -> vector<4x256xf32>
    %cst_10 = arith.constant 0.000000e+00 : f32
    %19 = vector.shape_cast %6 : vector<1x256xi1> to vector<1x256xi1>
    %20 = vector.broadcast %19 : vector<1x256xi1> to vector<4x256xi1>
    %21 = vector.broadcast %cst_10 : f32 to vector<4x256xf32>
    %22 = arith.select %20, %18, %21 : vector<4x256xi1>, vector<4x256xf32>
    %c0_11 = arith.constant 0 : index
    %c0_12 = arith.constant 0 : index
    %23 = vector.load %arg3[%c0_11, %c0_12] : memref<4x9xf32, #tpu.memory_space<vmem>>, vector<4x9xf32>
    %c0_13 = arith.constant 0 : index
    %c0_14 = arith.constant 0 : index
    %24 = vector.load %arg4[%c0_13, %c0_14] : memref<4x9xf32, #tpu.memory_space<vmem>>, vector<4x9xf32>
    %25 = vector.extract_strided_slice %23 {offsets = [0, 0], sizes = [4, 1], strides = [1, 1]} : vector<4x9xf32> to vector<4x1xf32>
    %26 = vector.extract_strided_slice %23 {offsets = [0, 1], sizes = [4, 1], strides = [1, 1]} : vector<4x9xf32> to vector<4x1xf32>
    %27 = vector.extract_strided_slice %23 {offsets = [0, 2], sizes = [4, 1], strides = [1, 1]} : vector<4x9xf32> to vector<4x1xf32>
    %28 = vector.extract_strided_slice %23 {offsets = [0, 3], sizes = [4, 1], strides = [1, 1]} : vector<4x9xf32> to vector<4x1xf32>
    %29 = vector.extract_strided_slice %23 {offsets = [0, 4], sizes = [4, 1], strides = [1, 1]} : vector<4x9xf32> to vector<4x1xf32>
    %30 = vector.extract_strided_slice %23 {offsets = [0, 5], sizes = [4, 1], strides = [1, 1]} : vector<4x9xf32> to vector<4x1xf32>
    %31 = vector.extract_strided_slice %23 {offsets = [0, 6], sizes = [4, 1], strides = [1, 1]} : vector<4x9xf32> to vector<4x1xf32>
    %32 = vector.extract_strided_slice %23 {offsets = [0, 7], sizes = [4, 1], strides = [1, 1]} : vector<4x9xf32> to vector<4x1xf32>
    %33 = vector.extract_strided_slice %23 {offsets = [0, 8], sizes = [4, 1], strides = [1, 1]} : vector<4x9xf32> to vector<4x1xf32>
    %34 = vector.extract_strided_slice %24 {offsets = [0, 0], sizes = [4, 1], strides = [1, 1]} : vector<4x9xf32> to vector<4x1xf32>
    %35 = vector.extract_strided_slice %24 {offsets = [0, 1], sizes = [4, 1], strides = [1, 1]} : vector<4x9xf32> to vector<4x1xf32>
    %36 = vector.extract_strided_slice %24 {offsets = [0, 2], sizes = [4, 1], strides = [1, 1]} : vector<4x9xf32> to vector<4x1xf32>
    %37 = vector.extract_strided_slice %24 {offsets = [0, 3], sizes = [4, 1], strides = [1, 1]} : vector<4x9xf32> to vector<4x1xf32>
    %38 = vector.extract_strided_slice %24 {offsets = [0, 4], sizes = [4, 1], strides = [1, 1]} : vector<4x9xf32> to vector<4x1xf32>
    %39 = vector.extract_strided_slice %24 {offsets = [0, 5], sizes = [4, 1], strides = [1, 1]} : vector<4x9xf32> to vector<4x1xf32>
    %40 = vector.extract_strided_slice %24 {offsets = [0, 6], sizes = [4, 1], strides = [1, 1]} : vector<4x9xf32> to vector<4x1xf32>
    %41 = vector.extract_strided_slice %24 {offsets = [0, 7], sizes = [4, 1], strides = [1, 1]} : vector<4x9xf32> to vector<4x1xf32>
    %42 = vector.extract_strided_slice %24 {offsets = [0, 8], sizes = [4, 1], strides = [1, 1]} : vector<4x9xf32> to vector<4x1xf32>
    %43 = vector.broadcast %25 : vector<4x1xf32> to vector<4x256xf32>
    %44 = arith.mulf %43, %17 : vector<4x256xf32>
    %45 = vector.broadcast %26 : vector<4x1xf32> to vector<4x256xf32>
    %46 = arith.mulf %45, %1 : vector<4x256xf32>
    %47 = arith.addf %44, %46 : vector<4x256xf32>
    %48 = vector.broadcast %27 : vector<4x1xf32> to vector<4x256xf32>
    %49 = arith.mulf %48, %22 : vector<4x256xf32>
    %50 = arith.addf %47, %49 : vector<4x256xf32>
    %c1_i32 = arith.constant 1 : i32
    %51 = tpu.dynamic_rotate %50 by %c1_i32 dim 1 : vector<4x256xf32>, i32 -> vector<4x256xf32>
    %cst_15 = arith.constant 0.000000e+00 : f32
    %52 = vector.shape_cast %9 : vector<1x256xi1> to vector<1x256xi1>
    %53 = vector.broadcast %52 : vector<1x256xi1> to vector<4x256xi1>
    %54 = vector.broadcast %cst_15 : f32 to vector<4x256xf32>
    %55 = arith.select %53, %51, %54 : vector<4x256xi1>, vector<4x256xf32>
    %c255_i32 = arith.constant 255 : i32
    %56 = tpu.dynamic_rotate %50 by %c255_i32 dim 1 : vector<4x256xf32>, i32 -> vector<4x256xf32>
    %cst_16 = arith.constant 0.000000e+00 : f32
    %57 = vector.shape_cast %12 : vector<1x256xi1> to vector<1x256xi1>
    %58 = vector.broadcast %57 : vector<1x256xi1> to vector<4x256xi1>
    %59 = vector.broadcast %cst_16 : f32 to vector<4x256xf32>
    %60 = arith.select %58, %56, %59 : vector<4x256xi1>, vector<4x256xf32>
    %61 = vector.broadcast %34 : vector<4x1xf32> to vector<4x256xf32>
    %62 = arith.mulf %61, %55 : vector<4x256xf32>
    %63 = vector.broadcast %35 : vector<4x1xf32> to vector<4x256xf32>
    %64 = arith.mulf %63, %50 : vector<4x256xf32>
    %65 = arith.addf %62, %64 : vector<4x256xf32>
    %66 = vector.broadcast %36 : vector<4x1xf32> to vector<4x256xf32>
    %67 = arith.mulf %66, %60 : vector<4x256xf32>
    %68 = arith.addf %65, %67 : vector<4x256xf32>
    %c0_17 = arith.constant 0 : index
    %c0_18 = arith.constant 0 : index
    %c0_19 = arith.constant 0 : index
    %c0_20 = arith.constant 0 : index
    %69 = vector.load %arg7[%c0_17, %c0_18, %c0_19, %c0_20] : memref<1x9x4x256xf32, #tpu.memory_space<vmem>>, vector<1x1x4x256xf32>
    %70 = vector.shape_cast %69 : vector<1x1x4x256xf32> to vector<4x256xf32>
    %71 = vector.shape_cast %68 : vector<4x256xf32> to vector<1x1x4x256xf32>
    tpu.vector_store %arg7[%c0_17, %c0_18, %c0_19, %c0_20], %71 {strides = array<i32>} : memref<1x9x4x256xf32, #tpu.memory_space<vmem>>, vector<1x1x4x256xf32>,
    %72 = vector.broadcast %37 : vector<4x1xf32> to vector<4x256xf32>
    %73 = arith.mulf %72, %55 : vector<4x256xf32>
    %74 = vector.broadcast %38 : vector<4x1xf32> to vector<4x256xf32>
    %75 = arith.mulf %74, %50 : vector<4x256xf32>
    %76 = arith.addf %73, %75 : vector<4x256xf32>
    %77 = vector.broadcast %39 : vector<4x1xf32> to vector<4x256xf32>
    %78 = arith.mulf %77, %60 : vector<4x256xf32>
    %79 = arith.addf %76, %78 : vector<4x256xf32>
    %c0_21 = arith.constant 0 : index
    %c1 = arith.constant 1 : index
    %c0_22 = arith.constant 0 : index
    %c0_23 = arith.constant 0 : index
    %80 = vector.load %arg7[%c0_21, %c1, %c0_22, %c0_23] : memref<1x9x4x256xf32, #tpu.memory_space<vmem>>, vector<1x1x4x256xf32>
    %81 = vector.shape_cast %80 : vector<1x1x4x256xf32> to vector<4x256xf32>
    %82 = vector.shape_cast %79 : vector<4x256xf32> to vector<1x1x4x256xf32>
    tpu.vector_store %arg7[%c0_21, %c1, %c0_22, %c0_23], %82 {strides = array<i32>} : memref<1x9x4x256xf32, #tpu.memory_space<vmem>>, vector<1x1x4x256xf32>,
    %83 = vector.broadcast %40 : vector<4x1xf32> to vector<4x256xf32>
    %84 = arith.mulf %83, %55 : vector<4x256xf32>
    %85 = vector.broadcast %41 : vector<4x1xf32> to vector<4x256xf32>
    %86 = arith.mulf %85, %50 : vector<4x256xf32>
    %87 = arith.addf %84, %86 : vector<4x256xf32>
    %88 = vector.broadcast %42 : vector<4x1xf32> to vector<4x256xf32>
    %89 = arith.mulf %88, %60 : vector<4x256xf32>
    %90 = arith.addf %87, %89 : vector<4x256xf32>
    %c0_24 = arith.constant 0 : index
    %c2 = arith.constant 2 : index
    %c0_25 = arith.constant 0 : index
    %c0_26 = arith.constant 0 : index
    %91 = vector.load %arg7[%c0_24, %c2, %c0_25, %c0_26] : memref<1x9x4x256xf32, #tpu.memory_space<vmem>>, vector<1x1x4x256xf32>
    %92 = vector.shape_cast %91 : vector<1x1x4x256xf32> to vector<4x256xf32>
    %93 = vector.shape_cast %90 : vector<4x256xf32> to vector<1x1x4x256xf32>
    tpu.vector_store %arg7[%c0_24, %c2, %c0_25, %c0_26], %93 {strides = array<i32>} : memref<1x9x4x256xf32, #tpu.memory_space<vmem>>, vector<1x1x4x256xf32>,
    %94 = vector.broadcast %28 : vector<4x1xf32> to vector<4x256xf32>
    %95 = arith.mulf %94, %17 : vector<4x256xf32>
    %96 = vector.broadcast %29 : vector<4x1xf32> to vector<4x256xf32>
    %97 = arith.mulf %96, %1 : vector<4x256xf32>
    %98 = arith.addf %95, %97 : vector<4x256xf32>
    %99 = vector.broadcast %30 : vector<4x1xf32> to vector<4x256xf32>
    %100 = arith.mulf %99, %22 : vector<4x256xf32>
    %101 = arith.addf %98, %100 : vector<4x256xf32>
    %c1_i32_27 = arith.constant 1 : i32
    %102 = tpu.dynamic_rotate %101 by %c1_i32_27 dim 1 : vector<4x256xf32>, i32 -> vector<4x256xf32>
    %cst_28 = arith.constant 0.000000e+00 : f32
    %103 = vector.shape_cast %9 : vector<1x256xi1> to vector<1x256xi1>
    %104 = vector.broadcast %103 : vector<1x256xi1> to vector<4x256xi1>
    %105 = vector.broadcast %cst_28 : f32 to vector<4x256xf32>
    %106 = arith.select %104, %102, %105 : vector<4x256xi1>, vector<4x256xf32>
    %c255_i32_29 = arith.constant 255 : i32
    %107 = tpu.dynamic_rotate %101 by %c255_i32_29 dim 1 : vector<4x256xf32>, i32 -> vector<4x256xf32>
    %cst_30 = arith.constant 0.000000e+00 : f32
    %108 = vector.shape_cast %12 : vector<1x256xi1> to vector<1x256xi1>
    %109 = vector.broadcast %108 : vector<1x256xi1> to vector<4x256xi1>
    %110 = vector.broadcast %cst_30 : f32 to vector<4x256xf32>
    %111 = arith.select %109, %107, %110 : vector<4x256xi1>, vector<4x256xf32>
    %112 = vector.broadcast %34 : vector<4x1xf32> to vector<4x256xf32>
    %113 = arith.mulf %112, %106 : vector<4x256xf32>
    %114 = vector.broadcast %35 : vector<4x1xf32> to vector<4x256xf32>
    %115 = arith.mulf %114, %101 : vector<4x256xf32>
    %116 = arith.addf %113, %115 : vector<4x256xf32>
    %117 = vector.broadcast %36 : vector<4x1xf32> to vector<4x256xf32>
    %118 = arith.mulf %117, %111 : vector<4x256xf32>
    %119 = arith.addf %116, %118 : vector<4x256xf32>
    %c0_31 = arith.constant 0 : index
    %c3 = arith.constant 3 : index
    %c0_32 = arith.constant 0 : index
    %c0_33 = arith.constant 0 : index
    %120 = vector.load %arg7[%c0_31, %c3, %c0_32, %c0_33] : memref<1x9x4x256xf32, #tpu.memory_space<vmem>>, vector<1x1x4x256xf32>
    %121 = vector.shape_cast %120 : vector<1x1x4x256xf32> to vector<4x256xf32>
    %122 = vector.shape_cast %119 : vector<4x256xf32> to vector<1x1x4x256xf32>
    tpu.vector_store %arg7[%c0_31, %c3, %c0_32, %c0_33], %122 {strides = array<i32>} : memref<1x9x4x256xf32, #tpu.memory_space<vmem>>, vector<1x1x4x256xf32>,
    %123 = vector.broadcast %37 : vector<4x1xf32> to vector<4x256xf32>
    %124 = arith.mulf %123, %106 : vector<4x256xf32>
    %125 = vector.broadcast %38 : vector<4x1xf32> to vector<4x256xf32>
    %126 = arith.mulf %125, %101 : vector<4x256xf32>
    %127 = arith.addf %124, %126 : vector<4x256xf32>
    %128 = vector.broadcast %39 : vector<4x1xf32> to vector<4x256xf32>
    %129 = arith.mulf %128, %111 : vector<4x256xf32>
    %130 = arith.addf %127, %129 : vector<4x256xf32>
    %c0_34 = arith.constant 0 : index
    %c4 = arith.constant 4 : index
    %c0_35 = arith.constant 0 : index
    %c0_36 = arith.constant 0 : index
    %131 = vector.load %arg7[%c0_34, %c4, %c0_35, %c0_36] : memref<1x9x4x256xf32, #tpu.memory_space<vmem>>, vector<1x1x4x256xf32>
    %132 = vector.shape_cast %131 : vector<1x1x4x256xf32> to vector<4x256xf32>
    %133 = vector.shape_cast %130 : vector<4x256xf32> to vector<1x1x4x256xf32>
    tpu.vector_store %arg7[%c0_34, %c4, %c0_35, %c0_36], %133 {strides = array<i32>} : memref<1x9x4x256xf32, #tpu.memory_space<vmem>>, vector<1x1x4x256xf32>,
    %134 = vector.broadcast %40 : vector<4x1xf32> to vector<4x256xf32>
    %135 = arith.mulf %134, %106 : vector<4x256xf32>
    %136 = vector.broadcast %41 : vector<4x1xf32> to vector<4x256xf32>
    %137 = arith.mulf %136, %101 : vector<4x256xf32>
    %138 = arith.addf %135, %137 : vector<4x256xf32>
    %139 = vector.broadcast %42 : vector<4x1xf32> to vector<4x256xf32>
    %140 = arith.mulf %139, %111 : vector<4x256xf32>
    %141 = arith.addf %138, %140 : vector<4x256xf32>
    %c0_37 = arith.constant 0 : index
    %c5 = arith.constant 5 : index
    %c0_38 = arith.constant 0 : index
    %c0_39 = arith.constant 0 : index
    %142 = vector.load %arg7[%c0_37, %c5, %c0_38, %c0_39] : memref<1x9x4x256xf32, #tpu.memory_space<vmem>>, vector<1x1x4x256xf32>
    %143 = vector.shape_cast %142 : vector<1x1x4x256xf32> to vector<4x256xf32>
    %144 = vector.shape_cast %141 : vector<4x256xf32> to vector<1x1x4x256xf32>
    tpu.vector_store %arg7[%c0_37, %c5, %c0_38, %c0_39], %144 {strides = array<i32>} : memref<1x9x4x256xf32, #tpu.memory_space<vmem>>, vector<1x1x4x256xf32>,
    %145 = vector.broadcast %31 : vector<4x1xf32> to vector<4x256xf32>
    %146 = arith.mulf %145, %17 : vector<4x256xf32>
    %147 = vector.broadcast %32 : vector<4x1xf32> to vector<4x256xf32>
    %148 = arith.mulf %147, %1 : vector<4x256xf32>
    %149 = arith.addf %146, %148 : vector<4x256xf32>
    %150 = vector.broadcast %33 : vector<4x1xf32> to vector<4x256xf32>
    %151 = arith.mulf %150, %22 : vector<4x256xf32>
    %152 = arith.addf %149, %151 : vector<4x256xf32>
    %c1_i32_40 = arith.constant 1 : i32
    %153 = tpu.dynamic_rotate %152 by %c1_i32_40 dim 1 : vector<4x256xf32>, i32 -> vector<4x256xf32>
    %cst_41 = arith.constant 0.000000e+00 : f32
    %154 = vector.shape_cast %9 : vector<1x256xi1> to vector<1x256xi1>
    %155 = vector.broadcast %154 : vector<1x256xi1> to vector<4x256xi1>
    %156 = vector.broadcast %cst_41 : f32 to vector<4x256xf32>
    %157 = arith.select %155, %153, %156 : vector<4x256xi1>, vector<4x256xf32>
    %c255_i32_42 = arith.constant 255 : i32
    %158 = tpu.dynamic_rotate %152 by %c255_i32_42 dim 1 : vector<4x256xf32>, i32 -> vector<4x256xf32>
    %cst_43 = arith.constant 0.000000e+00 : f32
    %159 = vector.shape_cast %12 : vector<1x256xi1> to vector<1x256xi1>
    %160 = vector.broadcast %159 : vector<1x256xi1> to vector<4x256xi1>
    %161 = vector.broadcast %cst_43 : f32 to vector<4x256xf32>
    %162 = arith.select %160, %158, %161 : vector<4x256xi1>, vector<4x256xf32>
    %163 = vector.broadcast %34 : vector<4x1xf32> to vector<4x256xf32>
    %164 = arith.mulf %163, %157 : vector<4x256xf32>
    %165 = vector.broadcast %35 : vector<4x1xf32> to vector<4x256xf32>
    %166 = arith.mulf %165, %152 : vector<4x256xf32>
    %167 = arith.addf %164, %166 : vector<4x256xf32>
    %168 = vector.broadcast %36 : vector<4x1xf32> to vector<4x256xf32>
    %169 = arith.mulf %168, %162 : vector<4x256xf32>
    %170 = arith.addf %167, %169 : vector<4x256xf32>
    %c0_44 = arith.constant 0 : index
    %c6 = arith.constant 6 : index
    %c0_45 = arith.constant 0 : index
    %c0_46 = arith.constant 0 : index
    %171 = vector.load %arg7[%c0_44, %c6, %c0_45, %c0_46] : memref<1x9x4x256xf32, #tpu.memory_space<vmem>>, vector<1x1x4x256xf32>
    %172 = vector.shape_cast %171 : vector<1x1x4x256xf32> to vector<4x256xf32>
    %173 = vector.shape_cast %170 : vector<4x256xf32> to vector<1x1x4x256xf32>
    tpu.vector_store %arg7[%c0_44, %c6, %c0_45, %c0_46], %173 {strides = array<i32>} : memref<1x9x4x256xf32, #tpu.memory_space<vmem>>, vector<1x1x4x256xf32>,
    %174 = vector.broadcast %37 : vector<4x1xf32> to vector<4x256xf32>
    %175 = arith.mulf %174, %157 : vector<4x256xf32>
    %176 = vector.broadcast %38 : vector<4x1xf32> to vector<4x256xf32>
    %177 = arith.mulf %176, %152 : vector<4x256xf32>
    %178 = arith.addf %175, %177 : vector<4x256xf32>
    %179 = vector.broadcast %39 : vector<4x1xf32> to vector<4x256xf32>
    %180 = arith.mulf %179, %162 : vector<4x256xf32>
    %181 = arith.addf %178, %180 : vector<4x256xf32>
    %c0_47 = arith.constant 0 : index
    %c7 = arith.constant 7 : index
    %c0_48 = arith.constant 0 : index
    %c0_49 = arith.constant 0 : index
    %182 = vector.load %arg7[%c0_47, %c7, %c0_48, %c0_49] : memref<1x9x4x256xf32, #tpu.memory_space<vmem>>, vector<1x1x4x256xf32>
    %183 = vector.shape_cast %182 : vector<1x1x4x256xf32> to vector<4x256xf32>
    %184 = vector.shape_cast %181 : vector<4x256xf32> to vector<1x1x4x256xf32>
    tpu.vector_store %arg7[%c0_47, %c7, %c0_48, %c0_49], %184 {strides = array<i32>} : memref<1x9x4x256xf32, #tpu.memory_space<vmem>>, vector<1x1x4x256xf32>,
    %185 = vector.broadcast %40 : vector<4x1xf32> to vector<4x256xf32>
    %186 = arith.mulf %185, %157 : vector<4x256xf32>
    %187 = vector.broadcast %41 : vector<4x1xf32> to vector<4x256xf32>
    %188 = arith.mulf %187, %152 : vector<4x256xf32>
    %189 = arith.addf %186, %188 : vector<4x256xf32>
    %190 = vector.broadcast %42 : vector<4x1xf32> to vector<4x256xf32>
    %191 = arith.mulf %190, %162 : vector<4x256xf32>
    %192 = arith.addf %189, %191 : vector<4x256xf32>
    %c0_50 = arith.constant 0 : index
    %c8 = arith.constant 8 : index
    %c0_51 = arith.constant 0 : index
    %c0_52 = arith.constant 0 : index
    %193 = vector.load %arg7[%c0_50, %c8, %c0_51, %c0_52] : memref<1x9x4x256xf32, #tpu.memory_space<vmem>>, vector<1x1x4x256xf32>
    %194 = vector.shape_cast %193 : vector<1x1x4x256xf32> to vector<4x256xf32>
    %195 = vector.shape_cast %192 : vector<4x256xf32> to vector<1x1x4x256xf32>
    tpu.vector_store %arg7[%c0_50, %c8, %c0_51, %c0_52], %195 {strides = array<i32>} : memref<1x9x4x256xf32, #tpu.memory_space<vmem>>, vector<1x1x4x256xf32>,
    return
  }
  func.func @transform_0(%arg0: i32, %arg1: i32) -> (i32, i32, i32) {
    %c0_i32 = arith.constant 0 : i32
    %c0_i32_0 = arith.constant 0 : i32
    return %arg0, %arg1, %c0_i32 : i32, i32, i32
  }
  func.func @transform_1(%arg0: i32, %arg1: i32) -> (i32, i32) {
    %c0_i32 = arith.constant 0 : i32
    %c0_i32_0 = arith.constant 0 : i32
    return %arg1, %c0_i32 : i32, i32
  }
  func.func @transform_2(%arg0: i32, %arg1: i32) -> (i32, i32) {
    %c0_i32 = arith.constant 0 : i32
    %c0_i32_0 = arith.constant 0 : i32
    return %arg1, %c0_i32 : i32, i32
  }
  func.func @transform_3(%arg0: i32, %arg1: i32) -> (i32, i32) {
    %c0_i32 = arith.constant 0 : i32
    %c0_i32_0 = arith.constant 0 : i32
    %c0_i32_1 = arith.constant 0 : i32
    return %c0_i32, %c0_i32_0 : i32, i32
  }
  func.func @transform_4(%arg0: i32, %arg1: i32) -> (i32, i32) {
    %c0_i32 = arith.constant 0 : i32
    %c0_i32_0 = arith.constant 0 : i32
    %c0_i32_1 = arith.constant 0 : i32
    return %c0_i32, %c0_i32_0 : i32, i32
  }
  func.func @transform_5(%arg0: i32, %arg1: i32) -> (i32, i32, i32, i32) {
    %c0_i32 = arith.constant 0 : i32
    %c0_i32_0 = arith.constant 0 : i32
    %c0_i32_1 = arith.constant 0 : i32
    return %arg0, %c0_i32, %arg1, %c0_i32_0 : i32, i32, i32, i32
  }
}

</mosaic_0001>

<llo_original>
// kernel: tpu_custom_call.1
$region0: #{tpu_custom_call.1}
  #allocation0 [shape = 'u32[]', space=smem, size = 0x4, offset = 0x4, fixed_abs, tag = 'smem constant byte address 0x4 - core index']
  #allocation1 [shape = 'u32[72,128]{1,0:T(1,128)}', space=vmem, size = 0x9000, scoped, tag = 'internal scratch']
  %s0 = inlined_call_operand.hbm [shape: f32[2,4,256], index: 0, kind: input, shape index: {}]
  %s1 = inlined_call_operand.hbm [shape: f32[4,9], index: 1, kind: input, shape index: {}]
  %s2 = inlined_call_operand.hbm [shape: f32[4,9], index: 2, kind: input, shape index: {}]
  %s3 = inlined_call_operand.vmem [shape: f32[1,256], index: 3, kind: input, shape index: {}]
  %s4 = inlined_call_operand.hbm [shape: f32[1,256], index: 4, kind: input, shape index: {}]
  %s5 = inlined_call_operand.hbm [shape: f32[2,9,4,256], index: 5, kind: output, shape index: {}]
  %s6 = sld [smem:[#allocation0]]
  $region69: #{tpu_custom_call.1} parent=0
    _
  %s8 = ssub.s32 1, %s6
  %s9 = scalar_select 0, %s8, %s6
  $region1: #{tpu_custom_call.1} parent=0
    #allocation2 [shape = 'u8[8192]{0}', space=vmem, size = 0x2000, scoped, tag = 'input window, operand 0']
    #allocation3 [shape = 's32[2]{0}', space=sflag, size = 0x8, scoped, tag = 'scoped memory for tpu_custom_call.1']
    #allocation4 [shape = 's32[2]{0}', space=sflag, size = 0x8, scoped, tag = 'scoped memory for tpu_custom_call.1']
    #allocation5 [shape = 'u8[2048]{0}', space=vmem, size = 0x800, scoped, tag = 'input window, operand 1, single buffered']
    #allocation6 [shape = 's32[1]{0}', space=sflag, size = 0x4, scoped, tag = 'scoped memory for tpu_custom_call.1']
    #allocation7 [shape = 'u8[2048]{0}', space=vmem, size = 0x800, scoped, tag = 'input window, operand 2, single buffered']
    #allocation8 [shape = 'u8[1024]{0}', space=vmem, size = 0x400, scoped, tag = 'input window, operand 4, single buffered']
    #allocation9 [shape = 's32[1]{0}', space=sflag, size = 0x4, scoped, tag = 'scoped memory for tpu_custom_call.1']
    #allocation10 [shape = 'u8[73728]{0}', space=vmem, size = 0x12000, scoped, tag = 'output window, operand 0']
    %10 = vsyncpa [#allocation3], 0
    %s11 = scalar_lea.sflag [#allocation3], 1
    %12 = vsyncpa %s11, 0
    %13 = vsyncpa [#allocation6], 0
    %14 = vsyncpa [#allocation9], 0
    %15 = vsyncpa [#allocation4], 0
    %s16 = scalar_lea.sflag [#allocation4], 1
    %17 = vsyncpa %s16, 0
    loop: start=0, step=1, limit=4
    $region2: #{tpu_custom_call.1} parent=1 // loop_pre_header
      _
    $region3: #{tpu_custom_call.1} parent=1 // loop_header
      %s19 = sphi 0, %s23
      %p20 = scmp.ge.s32.totalorder %s19, 4
      %s26 = sphi 0, %s38
      %s27 = sphi 0, %s34
      %s28 = sphi 0, %s26
      %s29 = sphi 0, %s27
      %s30 = sphi 0, %s28
      %s31 = sphi 0, %s29
      %s43 = sphi 0, %s45
      %s46 = sphi 0, %s43
      %s47 = sphi 0, %s46
      %s63 = sphi 0, %s47
      %s69 = sphi 0, %s71
      %s72 = sphi 0, %s69
      %s73 = sphi 0, %s72
      %s89 = sphi 0, %s73
      %s95 = sphi 0, %s97
      %s98 = sphi 0, %s95
      %s99 = sphi 0, %s98
      %s115 = sphi 0, %s99
      %s119 = sphi 0, %s119
      %s121 = sphi 0, %s119
      %s122 = sphi 0, %s121
      %s136 = sphi 0, %s122
      %s140 = sphi 0, %s140
      %s142 = sphi 0, %s140
      %s143 = sphi 0, %s142
      %s157 = sphi 0, %s143
      %s165 = sphi 0, %s167
      %s168 = sphi 0, %s165
      %s169 = sphi 0, %s168
      %s185 = sphi 0, %s169
    $region4: #{tpu_custom_call.1} parent=1 // loop_header_branch
      %22 = sbr.rel (%p20) target = $region8
    $region5: #{tpu_custom_call.1} parent=1 // loop_body
      %s24 = ssub.s32 %s19, 1
      %s25 = ssub.s32 %s19, 2
      %s32 = sadd.s32 1, %s27
      %p33 = scmp.ge.s32.totalorder %s32, 1
      %s34 = scalar_select %p33, 0, %s32
      %s35 = sadd.s32 1, %s26
      %s36 = scalar_select %p33, %s35, %s26
      %p37 = scmp.ge.s32.totalorder %s36, 2
      %s38 = scalar_select %p37, 0, %s36
      %s39 = ssub.s32 %s26, %s38
      %s40 = ssub.s32 %s27, %s34
      %s41 = sor.u32 %s39, %s40
      %p42 = scmp.eq.s32.totalorder %s41, 0
      %s44 = sadd.s32 %s43, 1
      %s45 = scalar_select %p42, %s43, %s44
      %p48 = pneg %p42
      %p49 = scmp.eq.s32.totalorder %s19, 1
      %p50 = por %p48, %p49
      %p51 = scmp.ne.s32.totalorder %s43, %s46
      %p52 = scmp.eq.s32.totalorder %s19, 0
      %p53 = por %p51, %p52
      %p54 = scmp.ne.s32.totalorder %s43, %s46
      %p55 = scmp.eq.s32.totalorder %s24, 1
      %p56 = por %p54, %p55
      %p57 = scmp.ne.s32.totalorder %s46, %s47
      %p58 = scmp.eq.s32.totalorder %s24, 0
      %p59 = por %p57, %p58
      %p60 = scmp.ne.s32.totalorder %s46, %s47
      %p61 = scmp.eq.s32.totalorder %s25, 1
      %p62 = por %p60, %p61
      %p64 = scmp.ne.s32.totalorder %s47, %s63
      %p65 = scmp.eq.s32.totalorder %s25, 0
      %p66 = por %p64, %p65
      %s67 = ssub.s32 %s27, %s34
      %p68 = scmp.eq.s32.totalorder %s67, 0
      %s70 = sadd.s32 %s69, 1
      %s71 = scalar_select %p68, %s69, %s70
      %p74 = pneg %p68
      %p75 = scmp.eq.s32.totalorder %s19, 1
      %p76 = por %p74, %p75
      %p77 = scmp.ne.s32.totalorder %s69, %s72
      %p78 = scmp.eq.s32.totalorder %s19, 0
      %p79 = por %p77, %p78
      %p80 = scmp.ne.s32.totalorder %s69, %s72
      %p81 = scmp.eq.s32.totalorder %s24, 1
      %p82 = por %p80, %p81
      %p83 = scmp.ne.s32.totalorder %s72, %s73
      %p84 = scmp.eq.s32.totalorder %s24, 0
      %p85 = por %p83, %p84
      %p86 = scmp.ne.s32.totalorder %s72, %s73
      %p87 = scmp.eq.s32.totalorder %s25, 1
      %p88 = por %p86, %p87
      %p90 = scmp.ne.s32.totalorder %s73, %s89
      %p91 = scmp.eq.s32.totalorder %s25, 0
      %p92 = por %p90, %p91
      %s93 = ssub.s32 %s27, %s34
      %p94 = scmp.eq.s32.totalorder %s93, 0
      %s96 = sadd.s32 %s95, 1
      %s97 = scalar_select %p94, %s95, %s96
      %p100 = pneg %p94
      %p101 = scmp.eq.s32.totalorder %s19, 1
      %p102 = por %p100, %p101
      %p103 = scmp.ne.s32.totalorder %s95, %s98
      %p104 = scmp.eq.s32.totalorder %s19, 0
      %p105 = por %p103, %p104
      %p106 = scmp.ne.s32.totalorder %s95, %s98
      %p107 = scmp.eq.s32.totalorder %s24, 1
      %p108 = por %p106, %p107
      %p109 = scmp.ne.s32.totalorder %s98, %s99
      %p110 = scmp.eq.s32.totalorder %s24, 0
      %p111 = por %p109, %p110
      %p112 = scmp.ne.s32.totalorder %s98, %s99
      %p113 = scmp.eq.s32.totalorder %s25, 1
      %p114 = por %p112, %p113
      %p116 = scmp.ne.s32.totalorder %s99, %s115
      %p117 = scmp.eq.s32.totalorder %s25, 0
      %p118 = por %p116, %p117
      %s120 = sadd.s32 %s119, 1
      %p123 = scmp.eq.s32.totalorder %s19, 1
      %p124 = scmp.ne.s32.totalorder %s119, %s121
      %p125 = scmp.eq.s32.totalorder %s19, 0
      %p126 = por %p124, %p125
      %p127 = scmp.ne.s32.totalorder %s119, %s121
      %p128 = scmp.eq.s32.totalorder %s24, 1
      %p129 = por %p127, %p128
      %p130 = scmp.ne.s32.totalorder %s121, %s122
      %p131 = scmp.eq.s32.totalorder %s24, 0
      %p132 = por %p130, %p131
      %p133 = scmp.ne.s32.totalorder %s121, %s122
      %p134 = scmp.eq.s32.totalorder %s25, 1
      %p135 = por %p133, %p134
      %p137 = scmp.ne.s32.totalorder %s122, %s136
      %p138 = scmp.eq.s32.totalorder %s25, 0
      %p139 = por %p137, %p138
      %s141 = sadd.s32 %s140, 1
      %p144 = scmp.eq.s32.totalorder %s19, 1
      %p145 = scmp.ne.s32.totalorder %s140, %s142
      %p146 = scmp.eq.s32.totalorder %s19, 0
      %p147 = por %p145, %p146
      %p148 = scmp.ne.s32.totalorder %s140, %s142
      %p149 = scmp.eq.s32.totalorder %s24, 1
      %p150 = por %p148, %p149
      %p151 = scmp.ne.s32.totalorder %s142, %s143
      %p152 = scmp.eq.s32.totalorder %s24, 0
      %p153 = por %p151, %p152
      %p154 = scmp.ne.s32.totalorder %s142, %s143
      %p155 = scmp.eq.s32.totalorder %s25, 1
      %p156 = por %p154, %p155
      %p158 = scmp.ne.s32.totalorder %s143, %s157
      %p159 = scmp.eq.s32.totalorder %s25, 0
      %p160 = por %p158, %p159
      %s161 = ssub.s32 %s26, %s38
      %s162 = ssub.s32 %s27, %s34
      %s163 = sor.u32 %s161, %s162
      %p164 = scmp.eq.s32.totalorder %s163, 0
      %s166 = sadd.s32 %s165, 1
      %s167 = scalar_select %p164, %s165, %s166
      %p170 = pneg %p164
      %p171 = scmp.eq.s32.totalorder %s19, 1
      %p172 = por %p170, %p171
      %p173 = scmp.ne.s32.totalorder %s165, %s168
      %p174 = scmp.eq.s32.totalorder %s19, 0
      %p175 = por %p173, %p174
      %p176 = scmp.ne.s32.totalorder %s165, %s168
      %p177 = scmp.eq.s32.totalorder %s24, 1
      %p178 = por %p176, %p177
      %p179 = scmp.ne.s32.totalorder %s168, %s169
      %p180 = scmp.eq.s32.totalorder %s24, 0
      %p181 = por %p179, %p180
      %p182 = scmp.ne.s32.totalorder %s168, %s169
      %p183 = scmp.eq.s32.totalorder %s25, 1
      %p184 = por %p182, %p183
      %p186 = scmp.ne.s32.totalorder %s169, %s185
      %p187 = scmp.eq.s32.totalorder %s25, 0
      %p188 = por %p186, %p187
      %p189 = scmp.le.s32.totalorder 1, %s19
      %p190 = scmp.lt.s32.totalorder %s19, 3
      %p191 = pnand %p189, %p190
      %p192 = pneg %p191
      // Predicated region
      $region9: #{tpu_custom_call.1} parent=5 // pred_check
        _
      $region10: #{tpu_custom_call.1} parent=5 // pred_check_branch
        %194 = sbr.rel (%p191) target = $region12
      $region11: #{tpu_custom_call.1} parent=5 // pred_region
        %s195 = ssub.s32 %s19, 1
        // Predicated region
        $region13: #{tpu_custom_call.1} parent=11 // pred_check
          %p196 = pneg %p85
        $region14: #{tpu_custom_call.1} parent=11 // pred_check_branch
          %198 = sbr.rel (%p196) target = $region16
        $region15: #{tpu_custom_call.1} parent=11 // pred_region
          %200 = vsyncadd [#allocation6], 0
          %s201 = smul.addr %s29, 4
          %s202 = scalar_lea.hbm %s1, %s201
          %s204 = sshll.u32 %s202, 4
          %s205 = int_to_ptr.hbm [resolvable:$true] %s204
          %s206 = sshll.u32 [#allocation5], 4
          %s207 = int_to_ptr.vmem [resolvable:$true] %s206
          %209 = dma.hbm_to_vmem [thread:$0]  %s205, 64, %s207, [#allocation6]
        $region16: #{tpu_custom_call.1} parent=11 // pred_fallthru
          _
        // Predicated region
        $region17: #{tpu_custom_call.1} parent=11 // pred_check
          %p210 = pneg %p111
        $region18: #{tpu_custom_call.1} parent=11 // pred_check_branch
          %212 = sbr.rel (%p210) target = $region20
        $region19: #{tpu_custom_call.1} parent=11 // pred_region
          %214 = vsyncadd [#allocation6], 0
          %s215 = smul.addr %s29, 4
          %s216 = scalar_lea.hbm %s2, %s215
          %s218 = sshll.u32 %s216, 4
          %s219 = int_to_ptr.hbm [resolvable:$true] %s218
          %s220 = sshll.u32 [#allocation7], 4
          %s221 = int_to_ptr.vmem [resolvable:$true] %s220
          %223 = dma.hbm_to_vmem [thread:$0]  %s219, 64, %s221, [#allocation6]
        $region20: #{tpu_custom_call.1} parent=11 // pred_fallthru
          _
        // Predicated region
        $region21: #{tpu_custom_call.1} parent=11 // pred_check
          %p224 = pneg %p132
        $region22: #{tpu_custom_call.1} parent=11 // pred_check_branch
          %226 = sbr.rel (%p224) target = $region24
        $region23: #{tpu_custom_call.1} parent=11 // pred_region
          _
        $region24: #{tpu_custom_call.1} parent=11 // pred_fallthru
          _
        // Predicated region
        $region25: #{tpu_custom_call.1} parent=11 // pred_check
          %p227 = pneg %p153
        $region26: #{tpu_custom_call.1} parent=11 // pred_check_branch
          %229 = sbr.rel (%p227) target = $region28
        $region27: #{tpu_custom_call.1} parent=11 // pred_region
          %231 = vsyncadd [#allocation9], 0
          %s233 = sshll.u32 %s4, 4
          %s234 = int_to_ptr.hbm [resolvable:$true] %s233
          %s235 = sshll.u32 [#allocation8], 4
          %s236 = int_to_ptr.vmem [resolvable:$true] %s235
          %238 = dma.hbm_to_vmem [thread:$0]  %s234, 32, %s236, [#allocation9]
        $region28: #{tpu_custom_call.1} parent=11 // pred_fallthru
          _
      $region12: #{tpu_custom_call.1} parent=5 // pred_fallthru
        _
      %p239 = scmp.lt.s32.totalorder %s19, 2
      // Predicated region
      $region29: #{tpu_custom_call.1} parent=5 // pred_check
        %p240 = pneg %p239
      $region30: #{tpu_custom_call.1} parent=5 // pred_check_branch
        %242 = sbr.rel (%p240) target = $region32
      $region31: #{tpu_custom_call.1} parent=5 // pred_region
        // Predicated region
        $region33: #{tpu_custom_call.1} parent=31 // pred_check
          %p243 = pneg %p53
        $region34: #{tpu_custom_call.1} parent=31 // pred_check_branch
          %245 = sbr.rel (%p243) target = $region36
        $region35: #{tpu_custom_call.1} parent=31 // pred_region
          %s246 = sand.u32 %s43, 1
          %s247 = scalar_lea.sflag [#allocation3], %s246
          %s248 = sand.u32 %s43, 1
          %s249 = smul.addr %s248, 8
          %s250 = scalar_lea.vmem [#allocation2], %s249
          %252 = vsyncadd %s247, 0
          %s253 = smul.addr %s27, 2
          %s254 = smul.addr %s26, 2
          %s255 = sadd.s32 %s253, %s254
          %s256 = smul.addr %s255, 4
          %s257 = scalar_lea.hbm %s0, %s256
          %s259 = sshll.u32 %s257, 4
          %s260 = int_to_ptr.hbm [resolvable:$true] %s259
          %s261 = sshll.u32 %s250, 4
          %s262 = int_to_ptr.vmem [resolvable:$true] %s261
          %264 = dma.hbm_to_vmem [thread:$0]  %s260, 128, %s262, %s247
        $region36: #{tpu_custom_call.1} parent=31 // pred_fallthru
          _
      $region32: #{tpu_custom_call.1} parent=5 // pred_fallthru
        _
      %p265 = scmp.le.s32.totalorder 1, %s19
      %p266 = scmp.lt.s32.totalorder %s19, 3
      %p267 = pnand %p265, %p266
      %p268 = pneg %p267
      // Predicated region
      $region37: #{tpu_custom_call.1} parent=5 // pred_check
        _
      $region38: #{tpu_custom_call.1} parent=5 // pred_check_branch
        %270 = sbr.rel (%p267) target = $region40
      $region39: #{tpu_custom_call.1} parent=5 // pred_region
        %s271 = ssub.s32 %s19, 1
        %s272 = sand.u32 %s46, 1
        %s273 = scalar_lea.sflag [#allocation3], %s272
        %s274 = sand.u32 %s46, 1
        %s275 = smul.addr %s274, 8
        %s276 = scalar_lea.vmem [#allocation2], %s275
        // Predicated region
        $region41: #{tpu_custom_call.1} parent=39 // pred_check
          %p277 = pneg %p59
        $region42: #{tpu_custom_call.1} parent=39 // pred_check_branch
          %279 = sbr.rel (%p277) target = $region44
        $region43: #{tpu_custom_call.1} parent=39 // pred_region
          %281 = dma.done %s273, 128
        $region44: #{tpu_custom_call.1} parent=39 // pred_fallthru
          _
        // Predicated region
        $region45: #{tpu_custom_call.1} parent=39 // pred_check
          %p282 = pneg %p85
        $region46: #{tpu_custom_call.1} parent=39 // pred_check_branch
          %284 = sbr.rel (%p282) target = $region48
        $region47: #{tpu_custom_call.1} parent=39 // pred_region
          %286 = dma.done [#allocation6], 64
        $region48: #{tpu_custom_call.1} parent=39 // pred_fallthru
          _
        // Predicated region
        $region49: #{tpu_custom_call.1} parent=39 // pred_check
          %p287 = pneg %p111
        $region50: #{tpu_custom_call.1} parent=39 // pred_check_branch
          %289 = sbr.rel (%p287) target = $region52
        $region51: #{tpu_custom_call.1} parent=39 // pred_region
          %291 = dma.done [#allocation6], 64
        $region52: #{tpu_custom_call.1} parent=39 // pred_fallthru
          _
        // Predicated region
        $region53: #{tpu_custom_call.1} parent=39 // pred_check
          %p292 = pneg %p153
        $region54: #{tpu_custom_call.1} parent=39 // pred_check_branch
          %294 = sbr.rel (%p292) target = $region56
        $region55: #{tpu_custom_call.1} parent=39 // pred_region
          %296 = dma.done [#allocation9], 32
        $region56: #{tpu_custom_call.1} parent=39 // pred_fallthru
          _
        %s297 = sand.u32 %s46, 1
        %s298 = scalar_lea.sflag [#allocation3], %s297
        %s299 = sand.u32 %s46, 1
        %s300 = smul.addr %s299, 8
        %s301 = scalar_lea.vmem [#allocation2], %s300
        %p302 = pneg %p59
        %p303 = pneg %p56
        %p304 = pneg %p85
        %p305 = pneg %p82
        %p306 = pneg %p111
        %p307 = pneg %p108
        %p308 = pneg %p132
        %p309 = pneg %p129
        %p310 = pneg %p153
        %p311 = pneg %p150
        %p312 = pneg %p181
        %p313 = pneg %p178
        %s314 = sand.u32 %s168, 1
        %s315 = scalar_lea.sflag [#allocation4], %s314
        %s316 = sand.u32 %s168, 1
        %s317 = smul.addr %s316, 72
        %s318 = scalar_lea.vmem [#allocation10], %s317
        %v319 = vld [vmem:[%s276] sm:$0xff]
        %v320 = vlaneseq
        %v321 = vand.u32 %v320, 127
        %v322 = vadd.s32 %v321, 128
        %vm323 = vcmp.ge.s32.totalorder %v321, 16
        %vm324 = vcmp.ge.s32.totalorder %v322, 16
        %vm325 = vcmp.lt.s32.totalorder %v321, 240
        %vm326 = vcmp.lt.s32.totalorder %v322, 240
        %v327 = vld [vmem:[%s3] sm:$0x3]
        %vm328 = vcmp.ne.f32.partialorder %v327, 0.0
        %v329 = vld [vmem:[#allocation8] sm:$0x3]
        %vm330 = vcmp.ne.f32.partialorder %v329, 0.0
        %332 = vst [vmem:[#allocation1] ss:$2 sm:$0xff] %v319
        %v333 = vld.sshfl [vmem:[#allocation1] sm:$0xff pattern:$0x75316420]
        %v334 = vld.sshfl [vmem:[#allocation1 + $0x8] sm:$0xff pattern:$0x75316420]
        %337 = vrot.lane.b32.xlu0 %v333, 16
        %v338 = vpop.permute.xlu0 %337
        %339 = vrot.lane.b32.xlu0 %v334, 16
        %v340 = vpop.permute.xlu0 %339
        %vm341 = vcmp.lt.s32.totalorder %v321, 16
        %v342 = vsel %vm341, %v338, %v340
        %v343 = vsel %vm341, %v340, %v338
        %v344 = vsel %vm323, 1, 0
        %v345 = vsel %vm324, 1, 0
        %vm346 = vcmp.eq.s32.totalorder %v344, 1
        %vm347 = vcmp.eq.s32.totalorder %v345, 1
        %v348 = vsel %vm346, %v343, 0.0
        %v349 = vsel %vm347, %v342, 0.0
        %350 = vst [vmem:[#allocation1] ss:$2 sm:$0xff] %v319
        %v351 = vld.sshfl [vmem:[#allocation1] sm:$0xff pattern:$0x75316420]
        %v352 = vld.sshfl [vmem:[#allocation1 + $0x8] sm:$0xff pattern:$0x75316420]
        %355 = vrot.lane.b32.xlu0 %v351, 112
        %v356 = vpop.permute.xlu0 %355
        %357 = vrot.lane.b32.xlu0 %v352, 112
        %v358 = vpop.permute.xlu0 %357
        %vm359 = vcmp.lt.s32.totalorder %v321, 112
        %v360 = vsel %vm359, %v356, %v358
        %v361 = vsel %vm359, %v358, %v356
        %v362 = vsel %vm325, 1, 0
        %v363 = vsel %vm326, 1, 0
        %vm364 = vcmp.eq.s32.totalorder %v362, 1
        %vm365 = vcmp.eq.s32.totalorder %v363, 1
        %v366 = vsel %vm364, %v360, 0.0
        %v367 = vsel %vm365, %v361, 0.0
        %v368 = vld [vmem:[#allocation5] sm:$0xf]
        %v369 = vld [vmem:[#allocation7] sm:$0xf]
        %371 = vset.pattern.permute.xlu0 0
        %372 = vperm.xlu0 %371, %v368
        %v373 = vpop.permute.xlu0 %372
        %v375 = vmul.f32 %v373, %v348
        %v376 = vmul.f32 %v373, %v349
        %377 = vset.pattern.permute.xlu0 1
        %378 = vperm.xlu0 %377, %v368
        %v379 = vpop.permute.xlu0 %378
        %381 = vst [vmem:[#allocation1] ss:$2 sm:$0xff] %v319
        %v382 = vld.sshfl [vmem:[#allocation1] sm:$0xff pattern:$0x75316420]
        %v383 = vld.sshfl [vmem:[#allocation1 + $0x8] sm:$0xff pattern:$0x75316420]
        %v386 = vmul.f32 %v379, %v382
        %v387 = vmul.f32 %v379, %v383
        %v388 = vadd.f32 %v375, %v386
        %v389 = vadd.f32 %v376, %v387
        %390 = vset.pattern.permute.xlu0 2
        %391 = vperm.xlu0 %390, %v368
        %v392 = vpop.permute.xlu0 %391
        %v394 = vmul.f32 %v392, %v366
        %v395 = vmul.f32 %v392, %v367
        %v396 = vadd.f32 %v388, %v394
        %v397 = vadd.f32 %v389, %v395
        %398 = vrot.lane.b32.xlu0 %v396, 1
        %v399 = vpop.permute.xlu0 %398
        %400 = vrot.lane.b32.xlu0 %v397, 1
        %v401 = vpop.permute.xlu0 %400
        %vm402 = vcmp.lt.s32.totalorder %v321, 1
        %v403 = vsel %vm402, %v399, %v401
        %v404 = vsel %vm402, %v401, %v399
        %v405 = vsel %vm328, 1, 0
        %v406 = vperm.slane %v405, 0
        %v407 = vperm.slane %v405, 1
        %vm408 = vcmp.eq.s32.totalorder %v406, 1
        %vm409 = vcmp.eq.s32.totalorder %v407, 1
        %v410 = vsel %vm408, %v404, 0.0
        %v411 = vsel %vm409, %v403, 0.0
        %412 = vrot.lane.b32.xlu0 %v396, 127
        %v413 = vpop.permute.xlu0 %412
        %414 = vrot.lane.b32.xlu0 %v397, 127
        %v415 = vpop.permute.xlu0 %414
        %vm416 = vcmp.lt.s32.totalorder %v321, 127
        %v417 = vsel %vm416, %v413, %v415
        %v418 = vsel %vm416, %v415, %v413
        %v419 = vsel %vm330, 1, 0
        %v420 = vperm.slane %v419, 0
        %v421 = vperm.slane %v419, 1
        %vm422 = vcmp.eq.s32.totalorder %v420, 1
        %vm423 = vcmp.eq.s32.totalorder %v421, 1
        %v424 = vsel %vm422, %v417, 0.0
        %v425 = vsel %vm423, %v418, 0.0
        %427 = vset.pattern.permute.xlu0 0
        %428 = vperm.xlu0 %427, %v369
        %v429 = vpop.permute.xlu0 %428
        %v431 = vmul.f32 %v429, %v410
        %v432 = vmul.f32 %v429, %v411
        %433 = vset.pattern.permute.xlu0 1
        %434 = vperm.xlu0 %433, %v369
        %v435 = vpop.permute.xlu0 %434
        %v437 = vmul.f32 %v435, %v396
        %v438 = vmul.f32 %v435, %v397
        %v439 = vadd.f32 %v431, %v437
        %v440 = vadd.f32 %v432, %v438
        %441 = vset.pattern.permute.xlu0 2
        %442 = vperm.xlu0 %441, %v369
        %v443 = vpop.permute.xlu0 %442
        %v445 = vmul.f32 %v443, %v424
        %v446 = vmul.f32 %v443, %v425
        %v447 = vadd.f32 %v439, %v445
        %v448 = vadd.f32 %v440, %v446
        %v451 = vrot.slane %v448, 4
        %vm452 = vcmask 1043456
        %v453 = vsel %vm452, %v447, %v451
        %455 = vst [vmem:[%s318] sm:$0xff] %v453
        %456 = vset.pattern.permute.xlu0 3
        %457 = vperm.xlu0 %456, %v369
        %v458 = vpop.permute.xlu0 %457
        %v460 = vmul.f32 %v458, %v410
        %v461 = vmul.f32 %v458, %v411
        %462 = vset.pattern.permute.xlu0 4
        %463 = vperm.xlu0 %462, %v369
        %v464 = vpop.permute.xlu0 %463
        %v466 = vmul.f32 %v464, %v396
        %v467 = vmul.f32 %v464, %v397
        %v468 = vadd.f32 %v460, %v466
        %v469 = vadd.f32 %v461, %v467
        %470 = vset.pattern.permute.xlu0 5
        %471 = vperm.xlu0 %470, %v369
        %v472 = vpop.permute.xlu0 %471
        %v474 = vmul.f32 %v472, %v424
        %v475 = vmul.f32 %v472, %v425
        %v476 = vadd.f32 %v468, %v474
        %v477 = vadd.f32 %v469, %v475
        %v480 = vrot.slane %v477, 4
        %v481 = vsel %vm452, %v476, %v480
        %s483 = scalar_lea.vmem %s318, 8 [#allocation10]
        %484 = vst [vmem:[%s483] sm:$0xff] %v481
        %485 = vset.pattern.permute.xlu0 6
        %486 = vperm.xlu0 %485, %v369
        %v487 = vpop.permute.xlu0 %486
        %v489 = vmul.f32 %v487, %v410
        %v490 = vmul.f32 %v487, %v411
        %491 = vset.pattern.permute.xlu0 7
        %492 = vperm.xlu0 %491, %v369
        %v493 = vpop.permute.xlu0 %492
        %v495 = vmul.f32 %v493, %v396
        %v496 = vmul.f32 %v493, %v397
        %v497 = vadd.f32 %v489, %v495
        %v498 = vadd.f32 %v490, %v496
        %499 = vset.pattern.permute.xlu0 8
        %500 = vperm.xlu0 %499, %v369
        %v501 = vpop.permute.xlu0 %500
        %v503 = vmul.f32 %v501, %v424
        %v504 = vmul.f32 %v501, %v425
        %v505 = vadd.f32 %v497, %v503
        %v506 = vadd.f32 %v498, %v504
        %v509 = vrot.slane %v506, 4
        %v510 = vsel %vm452, %v505, %v509
        %s512 = scalar_lea.vmem %s318, 16 [#allocation10]
        %513 = vst [vmem:[%s512] sm:$0xff] %v510
        %514 = vset.pattern.permute.xlu0 3
        %515 = vperm.xlu0 %514, %v368
        %v516 = vpop.permute.xlu0 %515
        %v518 = vmul.f32 %v516, %v348
        %v519 = vmul.f32 %v516, %v349
        %520 = vset.pattern.permute.xlu0 4
        %521 = vperm.xlu0 %520, %v368
        %v522 = vpop.permute.xlu0 %521
        %524 = vst [vmem:[#allocation1] ss:$2 sm:$0xff] %v319
        %v525 = vld.sshfl [vmem:[#allocation1] sm:$0xff pattern:$0x75316420]
        %v526 = vld.sshfl [vmem:[#allocation1 + $0x8] sm:$0xff pattern:$0x75316420]
        %v529 = vmul.f32 %v522, %v525
        %v530 = vmul.f32 %v522, %v526
        %v531 = vadd.f32 %v518, %v529
        %v532 = vadd.f32 %v519, %v530
        %533 = vset.pattern.permute.xlu0 5
        %534 = vperm.xlu0 %533, %v368
        %v535 = vpop.permute.xlu0 %534
        %v537 = vmul.f32 %v535, %v366
        %v538 = vmul.f32 %v535, %v367
        %v539 = vadd.f32 %v531, %v537
        %v540 = vadd.f32 %v532, %v538
        %541 = vrot.lane.b32.xlu0 %v539, 1
        %v542 = vpop.permute.xlu0 %541
        %543 = vrot.lane.b32.xlu0 %v540, 1
        %v544 = vpop.permute.xlu0 %543
        %v545 = vsel %vm402, %v542, %v544
        %v546 = vsel %vm402, %v544, %v542
        %v547 = vsel %vm408, %v546, 0.0
        %v548 = vsel %vm409, %v545, 0.0
        %549 = vrot.lane.b32.xlu0 %v539, 127
        %v550 = vpop.permute.xlu0 %549
        %551 = vrot.lane.b32.xlu0 %v540, 127
        %v552 = vpop.permute.xlu0 %551
        %v553 = vsel %vm416, %v550, %v552
        %v554 = vsel %vm416, %v552, %v550
        %v555 = vsel %vm422, %v553, 0.0
        %v556 = vsel %vm423, %v554, 0.0
        %v557 = vmul.f32 %v429, %v547
        %v558 = vmul.f32 %v429, %v548
        %v559 = vmul.f32 %v435, %v539
        %v560 = vmul.f32 %v435, %v540
        %v561 = vadd.f32 %v557, %v559
        %v562 = vadd.f32 %v558, %v560
        %v563 = vmul.f32 %v443, %v555
        %v564 = vmul.f32 %v443, %v556
        %v565 = vadd.f32 %v561, %v563
        %v566 = vadd.f32 %v562, %v564
        %v569 = vrot.slane %v566, 4
        %v570 = vsel %vm452, %v565, %v569
        %s572 = scalar_lea.vmem %s318, 24 [#allocation10]
        %573 = vst [vmem:[%s572] sm:$0xff] %v570
        %v574 = vmul.f32 %v458, %v547
        %v575 = vmul.f32 %v458, %v548
        %v576 = vmul.f32 %v464, %v539
        %v577 = vmul.f32 %v464, %v540
        %v578 = vadd.f32 %v574, %v576
        %v579 = vadd.f32 %v575, %v577
        %v580 = vmul.f32 %v472, %v555
        %v581 = vmul.f32 %v472, %v556
        %v582 = vadd.f32 %v578, %v580
        %v583 = vadd.f32 %v579, %v581
        %v586 = vrot.slane %v583, 4
        %v587 = vsel %vm452, %v582, %v586
        %s589 = scalar_lea.vmem %s318, 32 [#allocation10]
        %590 = vst [vmem:[%s589] sm:$0xff] %v587
        %v591 = vmul.f32 %v487, %v547
        %v592 = vmul.f32 %v487, %v548
        %v593 = vmul.f32 %v493, %v539
        %v594 = vmul.f32 %v493, %v540
        %v595 = vadd.f32 %v591, %v593
        %v596 = vadd.f32 %v592, %v594
        %v597 = vmul.f32 %v501, %v555
        %v598 = vmul.f32 %v501, %v556
        %v599 = vadd.f32 %v595, %v597
        %v600 = vadd.f32 %v596, %v598
        %v603 = vrot.slane %v600, 4
        %v604 = vsel %vm452, %v599, %v603
        %s606 = scalar_lea.vmem %s318, 40 [#allocation10]
        %607 = vst [vmem:[%s606] sm:$0xff] %v604
        %608 = vset.pattern.permute.xlu0 6
        %609 = vperm.xlu0 %608, %v368
        %v610 = vpop.permute.xlu0 %609
        %v612 = vmul.f32 %v610, %v348
        %v613 = vmul.f32 %v610, %v349
        %614 = vset.pattern.permute.xlu0 7
        %615 = vperm.xlu0 %614, %v368
        %v616 = vpop.permute.xlu0 %615
        %618 = vst [vmem:[#allocation1] ss:$2 sm:$0xff] %v319
        %v619 = vld.sshfl [vmem:[#allocation1] sm:$0xff pattern:$0x75316420]
        %v620 = vld.sshfl [vmem:[#allocation1 + $0x8] sm:$0xff pattern:$0x75316420]
        %v623 = vmul.f32 %v616, %v619
        %v624 = vmul.f32 %v616, %v620
        %v625 = vadd.f32 %v612, %v623
        %v626 = vadd.f32 %v613, %v624
        %627 = vset.pattern.permute.xlu0 8
        %628 = vperm.xlu0 %627, %v368
        %v629 = vpop.permute.xlu0 %628
        %v631 = vmul.f32 %v629, %v366
        %v632 = vmul.f32 %v629, %v367
        %v633 = vadd.f32 %v625, %v631
        %v634 = vadd.f32 %v626, %v632
        %635 = vrot.lane.b32.xlu0 %v633, 1
        %v636 = vpop.permute.xlu0 %635
        %637 = vrot.lane.b32.xlu0 %v634, 1
        %v638 = vpop.permute.xlu0 %637
        %v639 = vsel %vm402, %v636, %v638
        %v640 = vsel %vm402, %v638, %v636
        %v641 = vsel %vm408, %v640, 0.0
        %v642 = vsel %vm409, %v639, 0.0
        %643 = vrot.lane.b32.xlu0 %v633, 127
        %v644 = vpop.permute.xlu0 %643
        %645 = vrot.lane.b32.xlu0 %v634, 127
        %v646 = vpop.permute.xlu0 %645
        %v647 = vsel %vm416, %v644, %v646
        %v648 = vsel %vm416, %v646, %v644
        %v649 = vsel %vm422, %v647, 0.0
        %v650 = vsel %vm423, %v648, 0.0
        %v651 = vmul.f32 %v429, %v641
        %v652 = vmul.f32 %v429, %v642
        %v653 = vmul.f32 %v435, %v633
        %v654 = vmul.f32 %v435, %v634
        %v655 = vadd.f32 %v651, %v653
        %v656 = vadd.f32 %v652, %v654
        %v657 = vmul.f32 %v443, %v649
        %v658 = vmul.f32 %v443, %v650
        %v659 = vadd.f32 %v655, %v657
        %v660 = vadd.f32 %v656, %v658
        %v663 = vrot.slane %v660, 4
        %v664 = vsel %vm452, %v659, %v663
        %s666 = scalar_lea.vmem %s318, 48 [#allocation10]
        %667 = vst [vmem:[%s666] sm:$0xff] %v664
        %v668 = vmul.f32 %v458, %v641
        %v669 = vmul.f32 %v458, %v642
        %v670 = vmul.f32 %v464, %v633
        %v671 = vmul.f32 %v464, %v634
        %v672 = vadd.f32 %v668, %v670
        %v673 = vadd.f32 %v669, %v671
        %v674 = vmul.f32 %v472, %v649
        %v675 = vmul.f32 %v472, %v650
        %v676 = vadd.f32 %v672, %v674
        %v677 = vadd.f32 %v673, %v675
        %v680 = vrot.slane %v677, 4
        %v681 = vsel %vm452, %v676, %v680
        %s683 = scalar_lea.vmem %s318, 56 [#allocation10]
        %684 = vst [vmem:[%s683] sm:$0xff] %v681
        %v685 = vmul.f32 %v487, %v641
        %v686 = vmul.f32 %v487, %v642
        %v687 = vmul.f32 %v493, %v633
        %v688 = vmul.f32 %v493, %v634
        %v689 = vadd.f32 %v685, %v687
        %v690 = vadd.f32 %v686, %v688
        %v691 = vmul.f32 %v501, %v649
        %v692 = vmul.f32 %v501, %v650
        %v693 = vadd.f32 %v689, %v691
        %v694 = vadd.f32 %v690, %v692
        %v697 = vrot.slane %v694, 4
        %v698 = vsel %vm452, %v693, %v697
        %s700 = scalar_lea.vmem %s318, 64 [#allocation10]
        %701 = vst [vmem:[%s700] sm:$0xff] %v698
        %s702 = sand.u32 %s168, 1
        %s703 = scalar_lea.sflag [#allocation4], %s702
        %s704 = sand.u32 %s168, 1
        %s705 = smul.addr %s704, 72
        %s706 = scalar_lea.vmem [#allocation10], %s705
        // Predicated region
        $region57: #{tpu_custom_call.1} parent=39 // pred_check
          %p707 = pneg %p178
        $region58: #{tpu_custom_call.1} parent=39 // pred_check_branch
          %709 = sbr.rel (%p707) target = $region60
        $region59: #{tpu_custom_call.1} parent=39 // pred_region
          %711 = vsyncadd %s703, 0
          %s712 = smul.addr %s29, 2
          %s713 = smul.addr %s28, 18
          %s714 = sadd.s32 %s712, %s713
          %s715 = smul.addr %s714, 4
          %s716 = scalar_lea.hbm %s5, %s715
          %s717 = sshll.u32 %s706, 4
          %s718 = int_to_ptr.vmem [resolvable:$true] %s717
          %s719 = sshll.u32 %s716, 4
          %s720 = int_to_ptr.hbm [resolvable:$true] %s719
          %725 = dma.vmem_to_hbm [thread:$0]  %s718, 1152, %s720, %s703, 128, 128, 8
        $region60: #{tpu_custom_call.1} parent=39 // pred_fallthru
          _
      $region40: #{tpu_custom_call.1} parent=5 // pred_fallthru
        _
      %p726 = scmp.le.s32.totalorder 2, %s19
      // Predicated region
      $region61: #{tpu_custom_call.1} parent=5 // pred_check
        %p727 = pneg %p726
      $region62: #{tpu_custom_call.1} parent=5 // pred_check_branch
        %729 = sbr.rel (%p727) target = $region64
      $region63: #{tpu_custom_call.1} parent=5 // pred_region
        %s730 = ssub.s32 %s19, 2
        // Predicated region
        $region65: #{tpu_custom_call.1} parent=63 // pred_check
          %p731 = pneg %p184
        $region66: #{tpu_custom_call.1} parent=63 // pred_check_branch
          %733 = sbr.rel (%p731) target = $region68
        $region67: #{tpu_custom_call.1} parent=63 // pred_region
          %s734 = sand.u32 %s169, 1
          %s735 = scalar_lea.sflag [#allocation4], %s734
          %s736 = sand.u32 %s169, 1
          %s737 = smul.addr %s736, 72
          %s738 = scalar_lea.vmem [#allocation10], %s737
          %740 = dma.done %s735, 1152
        $region68: #{tpu_custom_call.1} parent=63 // pred_fallthru
          _
      $region64: #{tpu_custom_call.1} parent=5 // pred_fallthru
        _
    $region6: #{tpu_custom_call.1} parent=1 // loop_footer
      %s23 = sadd.s32 1, %s19
    $region7: #{tpu_custom_call.1} parent=1 // loop_footer_branch
      %18 = sbr.rel target = $region3
    $region8: #{tpu_custom_call.1} parent=1 // loop_exit
      _
    %741 = vsyncpa [#allocation3], 1
    %s742 = scalar_lea.sflag [#allocation3], 1
    %743 = vsyncpa %s742, 1
    %744 = vsyncpa [#allocation6], 1
    %745 = vsyncpa [#allocation9], 1
    %746 = vsyncpa [#allocation4], 1
    %s747 = scalar_lea.sflag [#allocation4], 1
    %748 = vsyncpa %s747, 1

</llo_original>
